<compile_context>
chip_gen: v7x
topology: tpu7x:2x2x1
jax: 0.10.0
libtpu: 0.0.40
codegen_flags: <defaults>
</compile_context>

<pallas_src>
import numpy as np
import jax
import jax.numpy as jnp
from jax.experimental import pallas as pl
from jax.experimental.pallas import tpu as pltpu


def _lstm_cell(gates, hidden):
    # PyTorch LSTM gate order: i, f, g, o.  c_prev == 0 -> c = i * g (forget gate drops).
    i = jax.nn.sigmoid(gates[:, 0:hidden])
    g = jnp.tanh(gates[:, 2 * hidden:3 * hidden])
    o = jax.nn.sigmoid(gates[:, 3 * hidden:4 * hidden])
    return o * jnp.tanh(i * g)


def _make_kernel(num_layers, hidden):
    n_layer_refs = 2 * (num_layers - 1)

    def kernel(*refs):
        # inputs : x_col (R,1), w0_rep (R,4H), b0 (1,4H),
        #          [wlt_bf16 (H,4H), bl (1,4H)] * (L-1), fc_w (1,H), fc_b SMEM (1,)
        # outputs: yi block (R, 1)
        xcol_ref, w0_ref, b0_ref = refs[0], refs[1], refs[2]
        layer_refs = refs[3:3 + n_layer_refs]
        fcw_ref = refs[3 + n_layer_refs]
        fcb_ref = refs[4 + n_layer_refs]
        yi_ref = refs[5 + n_layer_refs]

        # ---- LSTM layer 0: lane-dense (R, 4H), pure VPU broadcast ------------
        gates = xcol_ref[...] * w0_ref[...] + b0_ref[...]        # (R, 4H) f32
        h = _lstm_cell(gates, hidden)                            # (R, H)  f32

        # ---- LSTM layers 1..L-1: bf16 GEMM, f32 accumulation -----------------
        for l in range(num_layers - 1):
            wlt = layer_refs[2 * l][...]                         # (H, 4H) bf16
            bl = layer_refs[2 * l + 1][...]                      # (1, 4H) f32
            g2 = jnp.dot(h.astype(jnp.bfloat16), wlt,
                         preferred_element_type=jnp.float32) + bl
            h = _lstm_cell(g2, hidden)                           # (R, H) f32

        # ---- fc on the 2-D h (reduce first; reshape of the tiny result is
        #      done in the wrapper) --------------------------------------------
        fcw = fcw_ref[...]                                       # (1, H)
        fcb = fcb_ref[0]                                         # scalar from SMEM
        yi_ref[...] = jnp.sum(h * fcw, axis=-1, keepdims=True) + fcb   # (R, 1)

    return kernel


def _genes_per_block(n_gene, n_timepoint, target_rows=1024):
    # Largest divisor GB of G with GB*T <= target_rows and a sublane-aligned block
    # (GB == G or GB % 8 == 0).  Halve target_rows for v7x (64 MiB VMEM) at scale.
    for gb in range(n_gene, 0, -1):
        if n_gene % gb:
            continue
        if gb * n_timepoint <= target_rows and (gb == n_gene or gb % 8 == 0):
            return gb
    return n_gene


def forward(x, params, num_layers, hidden):
    """Returns (y_pred (T,), yi_pred (G, T), attention_weight (G,))."""
    G, T = x.shape
    GB = _genes_per_block(G, T)
    NB = G // GB
    R = GB * T                                   # rows per grid step
    H4 = 4 * hidden

    w0t = jnp.transpose(params["w_ih"][0])       # (G, 4H) = W_ih0.T
    # TODO(synk): for very large G*T, replace the replicated W_ih0.T with the
    # one-hot (G*T, G) @ (G, 4H) MXU formulation to avoid the HBM blow-up.
    inputs = [
        x.reshape(G * T, 1),                                         # (G*T, 1)
        jnp.repeat(w0t, T, axis=0),                                  # (G*T, 4H)
        (params["b_ih"][0] + params["b_hh"][0])[None, :],            # (1, 4H)
    ]
    in_specs = [
        pl.BlockSpec((R, 1), lambda b: (b, 0)),
        pl.BlockSpec((R, H4), lambda b: (b, 0)),
        pl.BlockSpec((1, H4), lambda b: (0, 0)),
    ]
    for l in range(1, num_layers):
        inputs.append(jnp.transpose(params["w_ih"][l]).astype(jnp.bfloat16))  # (H,4H) bf16
        inputs.append((params["b_ih"][l] + params["b_hh"][l])[None, :])       # (1,4H) f32
        in_specs.append(pl.BlockSpec((hidden, H4), lambda b: (0, 0)))
        in_specs.append(pl.BlockSpec((1, H4), lambda b: (0, 0)))
    inputs.append(params["fc_w"])                                             # (1, H)
    in_specs.append(pl.BlockSpec((1, hidden), lambda b: (0, 0)))
    inputs.append(params["fc_b"])                                             # (1,) scalar
    in_specs.append(pl.BlockSpec(memory_space=pltpu.MemorySpace.SMEM))

    yi_flat = pl.pallas_call(
        _make_kernel(num_layers, hidden),
        grid=(NB,),
        out_shape=jax.ShapeDtypeStruct((G * T, 1), jnp.float32),
        in_specs=in_specs,
        out_specs=pl.BlockSpec((R, 1), lambda b: (b, 0)),
        compiler_params=pltpu.CompilerParams(
            dimension_semantics=("parallel",)),
    )(*inputs)

    yi_pred = yi_flat.reshape(G, T)

    # O(G + T) epilogue kept in plain XLA (per perf review: fuses with consumers).
    aw = params["attn_w"]                                   # (1, G)
    y_pred = jnp.dot(aw, yi_pred)[0]                        # (T,)
    attn = jax.nn.softmax(jnp.abs(aw), axis=1)[0]           # (G,)
    return y_pred, yi_pred, attn


# ------------------------- pure-JAX reference (mirrors PyTorch) ---------------
def reference(x, params, num_layers, hidden):
    G, T = x.shape

    def lstm_single_step(inp):  # inp: (T, in_dim), seq_len == 1, zero state
        h = inp
        for l in range(num_layers):
            gates = h @ params["w_ih"][l].T + params["b_ih"][l] + params["b_hh"][l]
            i = jax.nn.sigmoid(gates[:, :hidden])
            g = jnp.tanh(gates[:, 2 * hidden:3 * hidden])
            o = jax.nn.sigmoid(gates[:, 3 * hidden:])
            h = o * jnp.tanh(i * g)
        return h

    rows = []
    for i_gene in range(G):
        xi = jnp.zeros_like(x).at[i_gene].set(x[i_gene])
        h = lstm_single_step(xi.T)                             # (T, H)
        y = h @ params["fc_w"].T + params["fc_b"]              # (T, 1)
        rows.append(y[:, 0])
    yi_pred = jnp.stack(rows, axis=0)                          # (G, T)
    y_pred = jnp.transpose(jnp.transpose(yi_pred) @ params["attn_w"].T)[0]
    attn = jax.nn.softmax(jnp.abs(params["attn_w"]), axis=1)[0]
    return y_pred, yi_pred, attn


def init_params(key, input_size, hidden, num_layers):
    bound = 1.0 / np.sqrt(hidden)
    keys = jax.random.split(key, 3 * num_layers + 3)
    w_ih, b_ih, b_hh = [], [], []
    ki = 0
    for l in range(num_layers):
        in_dim = input_size if l == 0 else hidden
        w_ih.append(jax.random.uniform(keys[ki], (4 * hidden, in_dim),
                                       jnp.float32, -bound, bound)); ki += 1
        b_ih.append(jax.random.uniform(keys[ki], (4 * hidden,),
                                       jnp.float32, -bound, bound)); ki += 1
        b_hh.append(jax.random.uniform(keys[ki], (4 * hidden,),
                                       jnp.float32, -bound, bound)); ki += 1
    fc_w = jax.random.uniform(keys[ki], (1, hidden), jnp.float32, -bound, bound); ki += 1
    fc_b = jax.random.uniform(keys[ki], (1,), jnp.float32, -bound, bound); ki += 1
    abound = 1.0 / np.sqrt(input_size)
    attn_w = jax.random.uniform(keys[ki], (1, input_size), jnp.float32, -abound, abound)
    # NOTE: weight_hh_l* of the PyTorch LSTM is never observable here (seq_len=1,
    # zero initial hidden state), so only its bias b_hh contributes.
    return dict(w_ih=w_ih, b_ih=b_ih, b_hh=b_hh, fc_w=fc_w, fc_b=fc_b, attn_w=attn_w)


if __name__ == "__main__":
    n_gene = 8          # == LSTM input_size in this module
    n_timepoint = 16
    hidden_size = 32
    num_layers = 2

    key = jax.random.PRNGKey(0)
    k_x, k_p = jax.random.split(key)
    x = jax.random.normal(k_x, (n_gene, n_timepoint), jnp.float32)
    params = init_params(k_p, n_gene, hidden_size, num_layers)

    y_pred, yi_pred, attn_w = forward(x, params, num_layers, hidden_size)
    jax.block_until_ready((y_pred, yi_pred, attn_w))

    y_ref, yi_ref, attn_ref = reference(x, params, num_layers, hidden_size)
    # Tolerance loosened (per review) because the inter-layer GEMMs use bf16 inputs
    # with f32 accumulation; observed error is ~1e-3, well inside 2e-2.
    np.testing.assert_allclose(np.asarray(yi_pred), np.asarray(yi_ref), rtol=2e-2, atol=2e-2)
    np.testing.assert_allclose(np.asarray(y_pred), np.asarray(y_ref), rtol=2e-2, atol=2e-2)
    np.testing.assert_allclose(np.asarray(attn_w), np.asarray(attn_ref), rtol=1e-5, atol=1e-6)

    print("KERNEL_OK")
</pallas_src>

<mosaic_0001>
module attributes {stable_mosaic.version = 11 : i64} {
  func.func @kernel(%arg0: i32, %arg1: memref<128x1xf32, #tpu.memory_space<vmem>>, %arg2: memref<128x128xf32, #tpu.memory_space<vmem>>, %arg3: memref<1x128xf32, #tpu.memory_space<vmem>>, %arg4: memref<32x128xbf16, #tpu.memory_space<vmem>>, %arg5: memref<1x128xf32, #tpu.memory_space<vmem>>, %arg6: memref<1x32xf32, #tpu.memory_space<vmem>>, %arg7: memref<1xf32, #tpu.memory_space<smem>>, %arg8: memref<128x1xf32, #tpu.memory_space<vmem>>) attributes {dimension_semantics = [#tpu.dimension_semantics<parallel>], iteration_bounds = array<i64: 1>, scalar_prefetch = 0 : i64, scratch_operands = 0 : i64, tpu.core_type = #tpu.core_type<tc>, window_params = [{transform_indices = @transform_0, window_bounds = array<i64: 128, 1>}, {transform_indices = @transform_1, window_bounds = array<i64: 128, 128>}, {pipeline_mode = #tpu.pipeline_mode<synchronous>, transform_indices = @transform_2, window_bounds = array<i64: 1, 128>}, {pipeline_mode = #tpu.pipeline_mode<synchronous>, transform_indices = @transform_3, window_bounds = array<i64: 32, 128>}, {pipeline_mode = #tpu.pipeline_mode<synchronous>, transform_indices = @transform_4, window_bounds = array<i64: 1, 128>}, {pipeline_mode = #tpu.pipeline_mode<synchronous>, transform_indices = @transform_5, window_bounds = array<i64: 1, 32>}, {transform_indices = @transform_6, window_bounds = array<i64: 1>}, {transform_indices = @transform_7, window_bounds = array<i64: 128, 1>}]} {
    %c0 = arith.constant 0 : index
    %c0_0 = arith.constant 0 : index
    %0 = vector.load %arg1[%c0, %c0_0] : memref<128x1xf32, #tpu.memory_space<vmem>>, vector<128x1xf32>
    %c0_1 = arith.constant 0 : index
    %c0_2 = arith.constant 0 : index
    %1 = vector.load %arg2[%c0_1, %c0_2] : memref<128x128xf32, #tpu.memory_space<vmem>>, vector<128x128xf32>
    %2 = vector.broadcast %0 : vector<128x1xf32> to vector<128x128xf32>
    %3 = arith.mulf %2, %1 : vector<128x128xf32>
    %c0_3 = arith.constant 0 : index
    %c0_4 = arith.constant 0 : index
    %4 = vector.load %arg3[%c0_3, %c0_4] : memref<1x128xf32, #tpu.memory_space<vmem>>, vector<1x128xf32>
    %5 = vector.broadcast %4 : vector<1x128xf32> to vector<128x128xf32>
    %6 = arith.addf %3, %5 : vector<128x128xf32>
    %7 = vector.extract_strided_slice %6 {offsets = [0, 0], sizes = [128, 32], strides = [1, 1]} : vector<128x128xf32> to vector<128x32xf32>
    %8 = arith.negf %7 : vector<128x32xf32>
    %9 = math.exp %8 : vector<128x32xf32>
    %cst = arith.constant 1.000000e+00 : f32
    %10 = vector.broadcast %cst : f32 to vector<128x32xf32>
    %11 = arith.addf %10, %9 : vector<128x32xf32>
    %12 = arith.divf %10, %11 : vector<128x32xf32>
    %13 = vector.extract_strided_slice %6 {offsets = [0, 64], sizes = [128, 32], strides = [1, 1]} : vector<128x128xf32> to vector<128x32xf32>
    %14 = math.tanh %13 : vector<128x32xf32>
    %15 = vector.extract_strided_slice %6 {offsets = [0, 96], sizes = [128, 32], strides = [1, 1]} : vector<128x128xf32> to vector<128x32xf32>
    %16 = arith.negf %15 : vector<128x32xf32>
    %17 = math.exp %16 : vector<128x32xf32>
    %cst_5 = arith.constant 1.000000e+00 : f32
    %18 = vector.broadcast %cst_5 : f32 to vector<128x32xf32>
    %19 = arith.addf %18, %17 : vector<128x32xf32>
    %20 = arith.divf %18, %19 : vector<128x32xf32>
    %21 = arith.mulf %12, %14 : vector<128x32xf32>
    %22 = math.tanh %21 : vector<128x32xf32>
    %23 = arith.mulf %20, %22 : vector<128x32xf32>
    %c0_6 = arith.constant 0 : index
    %c0_7 = arith.constant 0 : index
    %24 = vector.load %arg4[%c0_6, %c0_7] : memref<32x128xbf16, #tpu.memory_space<vmem>>, vector<32x128xbf16>
    %c0_8 = arith.constant 0 : index
    %c0_9 = arith.constant 0 : index
    %25 = vector.load %arg5[%c0_8, %c0_9] : memref<1x128xf32, #tpu.memory_space<vmem>>, vector<1x128xf32>
    %26 = arith.truncf %23 : vector<128x32xf32> to vector<128x32xbf16>
    %cst_10 = arith.constant dense<0.000000e+00> : vector<128x128xf32>
    %27 = tpu.matmul %26, %24, %cst_10 {dimension_numbers = #tpu.dot_dimension_numbers<[1], [0], [0], [1], [0, 0, 1, 1], [], []>} : vector<128x32xbf16>, vector<32x128xbf16>, vector<128x128xf32> -> vector<128x128xf32>
    %28 = vector.broadcast %25 : vector<1x128xf32> to vector<128x128xf32>
    %29 = arith.addf %27, %28 : vector<128x128xf32>
    %30 = vector.extract_strided_slice %29 {offsets = [0, 0], sizes = [128, 32], strides = [1, 1]} : vector<128x128xf32> to vector<128x32xf32>
    %31 = arith.negf %30 : vector<128x32xf32>
    %32 = math.exp %31 : vector<128x32xf32>
    %cst_11 = arith.constant 1.000000e+00 : f32
    %33 = vector.broadcast %cst_11 : f32 to vector<128x32xf32>
    %34 = arith.addf %33, %32 : vector<128x32xf32>
    %35 = arith.divf %33, %34 : vector<128x32xf32>
    %36 = vector.extract_strided_slice %29 {offsets = [0, 64], sizes = [128, 32], strides = [1, 1]} : vector<128x128xf32> to vector<128x32xf32>
    %37 = math.tanh %36 : vector<128x32xf32>
    %38 = vector.extract_strided_slice %29 {offsets = [0, 96], sizes = [128, 32], strides = [1, 1]} : vector<128x128xf32> to vector<128x32xf32>
    %39 = arith.negf %38 : vector<128x32xf32>
    %40 = math.exp %39 : vector<128x32xf32>
    %cst_12 = arith.constant 1.000000e+00 : f32
    %41 = vector.broadcast %cst_12 : f32 to vector<128x32xf32>
    %42 = arith.addf %41, %40 : vector<128x32xf32>
    %43 = arith.divf %41, %42 : vector<128x32xf32>
    %44 = arith.mulf %35, %37 : vector<128x32xf32>
    %45 = math.tanh %44 : vector<128x32xf32>
    %46 = arith.mulf %43, %45 : vector<128x32xf32>
    %c0_13 = arith.constant 0 : index
    %c0_14 = arith.constant 0 : index
    %47 = vector.load %arg6[%c0_13, %c0_14] : memref<1x32xf32, #tpu.memory_space<vmem>>, vector<1x32xf32>
    %c0_15 = arith.constant 0 : index
    %48 = memref.load %arg7[%c0_15] : memref<1xf32, #tpu.memory_space<smem>>
    %49 = vector.broadcast %47 : vector<1x32xf32> to vector<128x32xf32>
    %50 = arith.mulf %46, %49 : vector<128x32xf32>
    %cst_16 = arith.constant dense<0.000000e+00> : vector<128xf32>
    %51 = vector.multi_reduction <add>, %50, %cst_16 [1] : vector<128x32xf32> to vector<128xf32>
    %52 = vector.shape_cast %51 : vector<128xf32> to vector<128x1xf32>
    %53 = vector.broadcast %48 : f32 to vector<128x1xf32>
    %54 = arith.addf %52, %53 : vector<128x1xf32>
    %c0_17 = arith.constant 0 : index
    %c0_18 = arith.constant 0 : index
    %55 = vector.load %arg8[%c0_17, %c0_18] : memref<128x1xf32, #tpu.memory_space<vmem>>, vector<128x1xf32>
    tpu.vector_store %arg8[%c0_17, %c0_18], %54 {strides = array<i32>} : memref<128x1xf32, #tpu.memory_space<vmem>>, vector<128x1xf32>,
    return
  }
  func.func @transform_0(%arg0: i32) -> (i32, i32) {
    %c0_i32 = arith.constant 0 : i32
    %c0_i32_0 = arith.constant 0 : i32
    return %arg0, %c0_i32 : i32, i32
  }
  func.func @transform_1(%arg0: i32) -> (i32, i32) {
    %c0_i32 = arith.constant 0 : i32
    %c0_i32_0 = arith.constant 0 : i32
    return %arg0, %c0_i32 : i32, i32
  }
  func.func @transform_2(%arg0: i32) -> (i32, i32) {
    %c0_i32 = arith.constant 0 : i32
    %c0_i32_0 = arith.constant 0 : i32
    %c0_i32_1 = arith.constant 0 : i32
    return %c0_i32, %c0_i32_0 : i32, i32
  }
  func.func @transform_3(%arg0: i32) -> (i32, i32) {
    %c0_i32 = arith.constant 0 : i32
    %c0_i32_0 = arith.constant 0 : i32
    %c0_i32_1 = arith.constant 0 : i32
    return %c0_i32, %c0_i32_0 : i32, i32
  }
  func.func @transform_4(%arg0: i32) -> (i32, i32) {
    %c0_i32 = arith.constant 0 : i32
    %c0_i32_0 = arith.constant 0 : i32
    %c0_i32_1 = arith.constant 0 : i32
    return %c0_i32, %c0_i32_0 : i32, i32
  }
  func.func @transform_5(%arg0: i32) -> (i32, i32) {
    %c0_i32 = arith.constant 0 : i32
    %c0_i32_0 = arith.constant 0 : i32
    %c0_i32_1 = arith.constant 0 : i32
    return %c0_i32, %c0_i32_0 : i32, i32
  }
  func.func @transform_6(%arg0: i32) -> i32 {
    %c0_i32 = arith.constant 0 : i32
    %c0_i32_0 = arith.constant 0 : i32
    return %c0_i32 : i32
  }
  func.func @transform_7(%arg0: i32) -> (i32, i32) {
    %c0_i32 = arith.constant 0 : i32
    %c0_i32_0 = arith.constant 0 : i32
    return %arg0, %c0_i32 : i32, i32
  }
}

</mosaic_0001>

<llo_original>
// kernel: tpu_custom_call.1
$region0: #{tpu_custom_call.1}
  #allocation0 [shape = 'u32[]', space=smem, size = 0x4, offset = 0x4, fixed_abs, tag = 'smem constant byte address 0x4 - core index']
  #allocation1 [shape = 'u32[144,128]{1,0:T(1,128)}', space=vmem, size = 0x12000, scoped, tag = 'internal scratch']
  #allocation2 [shape = 'f32[1]{0:T(128)S(6)}', space=smem, size = 0x200, scoped, tag = 'scoped memory for tpu_custom_call.1']
  %s0 = inlined_call_operand.vmem [shape: f32[128,1], index: 0, kind: input, shape index: {}]
  %s1 = inlined_call_operand.vmem [shape: f32[128,128], index: 1, kind: input, shape index: {}]
  %s2 = inlined_call_operand.hbm [shape: f32[1,128], index: 2, kind: input, shape index: {}]
  %s3 = inlined_call_operand.vmem [shape: bf16[32,128], index: 3, kind: input, shape index: {}]
  %s4 = inlined_call_operand.vmem [shape: f32[1,128], index: 4, kind: input, shape index: {}]
  %s5 = inlined_call_operand.vmem [shape: f32[1,32], index: 5, kind: input, shape index: {}]
  %s6 = inlined_call_operand.<no memory space> [shape: f32[1], index: 6, kind: input, shape index: {}]
  %s7 = inlined_call_operand.vmem [shape: f32[128,1], index: 7, kind: output, shape index: {}]
  %s8 = sld [smem:[#allocation0]]
  $region42: #{tpu_custom_call.1} parent=0
    _
  %s10 = ssub.s32 1, %s8
  %s11 = scalar_select 0, %s10, %s8
  %12 = sst [smem:[#allocation2]] %s6
  $region1: #{tpu_custom_call.1} parent=0
    #allocation3 [shape = 'u8[512]{0}', space=vmem, size = 0x400, scoped, tag = 'input window, operand 2, single buffered']
    #allocation4 [shape = 's32[1]{0}', space=sflag, size = 0x4, scoped, tag = 'scoped memory for tpu_custom_call.1']
    %13 = vsyncpa [#allocation4], 0
    // Predicated region
    $region2: #{tpu_custom_call.1} parent=1 // pred_check
      _
    $region3: #{tpu_custom_call.1} parent=1 // pred_check_branch
      %15 = sbr.rel (0) target = $region5
    $region4: #{tpu_custom_call.1} parent=1 // pred_region
      _
    $region5: #{tpu_custom_call.1} parent=1 // pred_fallthru
      _
    // Predicated region
    $region6: #{tpu_custom_call.1} parent=1 // pred_check
      _
    $region7: #{tpu_custom_call.1} parent=1 // pred_check_branch
      %17 = sbr.rel (0) target = $region9
    $region8: #{tpu_custom_call.1} parent=1 // pred_region
      _
    $region9: #{tpu_custom_call.1} parent=1 // pred_fallthru
      _
    // Predicated region
    $region10: #{tpu_custom_call.1} parent=1 // pred_check
      _
    $region11: #{tpu_custom_call.1} parent=1 // pred_check_branch
      %19 = sbr.rel (0) target = $region13
    $region12: #{tpu_custom_call.1} parent=1 // pred_region
      %s21 = ssub.s32 16, 16
      %22 = vsyncadd [#allocation4], %s21
      %s24 = sshll.u32 [#allocation3], 4
      %s25 = int_to_ptr.vmem [resolvable:$true] %s24
      %27 = dma.hbm_to_vmem [thread:$0]  %s2, 16, %s25, [#allocation4]
    $region13: #{tpu_custom_call.1} parent=1 // pred_fallthru
      _
    // Predicated region
    $region14: #{tpu_custom_call.1} parent=1 // pred_check
      _
    $region15: #{tpu_custom_call.1} parent=1 // pred_check_branch
      %29 = sbr.rel (0) target = $region17
    $region16: #{tpu_custom_call.1} parent=1 // pred_region
      _
    $region17: #{tpu_custom_call.1} parent=1 // pred_fallthru
      _
    // Predicated region
    $region18: #{tpu_custom_call.1} parent=1 // pred_check
      _
    $region19: #{tpu_custom_call.1} parent=1 // pred_check_branch
      %31 = sbr.rel (0) target = $region21
    $region20: #{tpu_custom_call.1} parent=1 // pred_region
      _
    $region21: #{tpu_custom_call.1} parent=1 // pred_fallthru
      _
    // Predicated region
    $region22: #{tpu_custom_call.1} parent=1 // pred_check
      _
    $region23: #{tpu_custom_call.1} parent=1 // pred_check_branch
      %33 = sbr.rel (0) target = $region25
    $region24: #{tpu_custom_call.1} parent=1 // pred_region
      _
    $region25: #{tpu_custom_call.1} parent=1 // pred_fallthru
      _
    // Predicated region
    $region26: #{tpu_custom_call.1} parent=1 // pred_check
      _
    $region27: #{tpu_custom_call.1} parent=1 // pred_check_branch
      %35 = sbr.rel (0) target = $region29
    $region28: #{tpu_custom_call.1} parent=1 // pred_region
      _
    $region29: #{tpu_custom_call.1} parent=1 // pred_fallthru
      _
    // Predicated region
    $region30: #{tpu_custom_call.1} parent=1 // pred_check
      _
    $region31: #{tpu_custom_call.1} parent=1 // pred_check_branch
      %37 = sbr.rel (0) target = $region33
    $region32: #{tpu_custom_call.1} parent=1 // pred_region
      %38 = dma.done [#allocation4], 16
    $region33: #{tpu_custom_call.1} parent=1 // pred_fallthru
      _
    %v40 = vld [vmem:[%s0] sm:$0xff]
    %v41 = vld [vmem:[%s0 + $0x8] sm:$0xff]
    %v42 = vld [vmem:[%s0 + $0x10] sm:$0xff]
    %v43 = vld [vmem:[%s0 + $0x18] sm:$0xff]
    %v44 = vld [vmem:[%s0 + $0x20] sm:$0xff]
    %v45 = vld [vmem:[%s0 + $0x28] sm:$0xff]
    %v46 = vld [vmem:[%s0 + $0x30] sm:$0xff]
    %v47 = vld [vmem:[%s0 + $0x38] sm:$0xff]
    %v48 = vld [vmem:[%s0 + $0x40] sm:$0xff]
    %v49 = vld [vmem:[%s0 + $0x48] sm:$0xff]
    %v50 = vld [vmem:[%s0 + $0x50] sm:$0xff]
    %v51 = vld [vmem:[%s0 + $0x58] sm:$0xff]
    %v52 = vld [vmem:[%s0 + $0x60] sm:$0xff]
    %v53 = vld [vmem:[%s0 + $0x68] sm:$0xff]
    %v54 = vld [vmem:[%s0 + $0x70] sm:$0xff]
    %v55 = vld [vmem:[%s0 + $0x78] sm:$0xff]
    %v56 = vld [vmem:[%s1] sm:$0xff]
    %v57 = vld [vmem:[%s1 + $0x8] sm:$0xff]
    %v58 = vld [vmem:[%s1 + $0x10] sm:$0xff]
    %v59 = vld [vmem:[%s1 + $0x18] sm:$0xff]
    %v60 = vld [vmem:[%s1 + $0x20] sm:$0xff]
    %v61 = vld [vmem:[%s1 + $0x28] sm:$0xff]
    %v62 = vld [vmem:[%s1 + $0x30] sm:$0xff]
    %v63 = vld [vmem:[%s1 + $0x38] sm:$0xff]
    %v64 = vld [vmem:[%s1 + $0x40] sm:$0xff]
    %v65 = vld [vmem:[%s1 + $0x48] sm:$0xff]
    %v66 = vld [vmem:[%s1 + $0x50] sm:$0xff]
    %v67 = vld [vmem:[%s1 + $0x58] sm:$0xff]
    %v68 = vld [vmem:[%s1 + $0x60] sm:$0xff]
    %v69 = vld [vmem:[%s1 + $0x68] sm:$0xff]
    %v70 = vld [vmem:[%s1 + $0x70] sm:$0xff]
    %v71 = vld [vmem:[%s1 + $0x78] sm:$0xff]
    %73 = vset.pattern.permute.xlu0 0
    %74 = vperm.xlu0 %73, %v40
    %v75 = vpop.permute.xlu0 %74
    %78 = vset.pattern.permute.xlu0 0
    %79 = vperm.xlu0 %78, %v41
    %v80 = vpop.permute.xlu0 %79
    %83 = vset.pattern.permute.xlu0 0
    %84 = vperm.xlu0 %83, %v42
    %v85 = vpop.permute.xlu0 %84
    %88 = vset.pattern.permute.xlu0 0
    %89 = vperm.xlu0 %88, %v43
    %v90 = vpop.permute.xlu0 %89
    %93 = vset.pattern.permute.xlu0 0
    %94 = vperm.xlu0 %93, %v44
    %v95 = vpop.permute.xlu0 %94
    %98 = vset.pattern.permute.xlu0 0
    %99 = vperm.xlu0 %98, %v45
    %v100 = vpop.permute.xlu0 %99
    %103 = vset.pattern.permute.xlu0 0
    %104 = vperm.xlu0 %103, %v46
    %v105 = vpop.permute.xlu0 %104
    %108 = vset.pattern.permute.xlu0 0
    %109 = vperm.xlu0 %108, %v47
    %v110 = vpop.permute.xlu0 %109
    %113 = vset.pattern.permute.xlu0 0
    %114 = vperm.xlu0 %113, %v48
    %v115 = vpop.permute.xlu0 %114
    %118 = vset.pattern.permute.xlu0 0
    %119 = vperm.xlu0 %118, %v49
    %v120 = vpop.permute.xlu0 %119
    %123 = vset.pattern.permute.xlu0 0
    %124 = vperm.xlu0 %123, %v50
    %v125 = vpop.permute.xlu0 %124
    %128 = vset.pattern.permute.xlu0 0
    %129 = vperm.xlu0 %128, %v51
    %v130 = vpop.permute.xlu0 %129
    %133 = vset.pattern.permute.xlu0 0
    %134 = vperm.xlu0 %133, %v52
    %v135 = vpop.permute.xlu0 %134
    %138 = vset.pattern.permute.xlu0 0
    %139 = vperm.xlu0 %138, %v53
    %v140 = vpop.permute.xlu0 %139
    %143 = vset.pattern.permute.xlu0 0
    %144 = vperm.xlu0 %143, %v54
    %v145 = vpop.permute.xlu0 %144
    %148 = vset.pattern.permute.xlu0 0
    %149 = vperm.xlu0 %148, %v55
    %v150 = vpop.permute.xlu0 %149
    %v152 = vmul.f32 %v75, %v56
    %v153 = vmul.f32 %v80, %v57
    %v154 = vmul.f32 %v85, %v58
    %v155 = vmul.f32 %v90, %v59
    %v156 = vmul.f32 %v95, %v60
    %v157 = vmul.f32 %v100, %v61
    %v158 = vmul.f32 %v105, %v62
    %v159 = vmul.f32 %v110, %v63
    %v160 = vmul.f32 %v115, %v64
    %v161 = vmul.f32 %v120, %v65
    %v162 = vmul.f32 %v125, %v66
    %v163 = vmul.f32 %v130, %v67
    %v164 = vmul.f32 %v135, %v68
    %v165 = vmul.f32 %v140, %v69
    %v166 = vmul.f32 %v145, %v70
    %v167 = vmul.f32 %v150, %v71
    %v168 = vld [vmem:[#allocation3] sm:$0x1]
    %v170 = vlaneseq
    %v171 = vshrl.u32 %v170, 7
    %v172 = vsub.s32 0, %v171
    %v173 = vrot.slane %v168, %v172
    %v175 = vadd.f32 %v152, %v173
    %v176 = vadd.f32 %v153, %v173
    %v177 = vadd.f32 %v154, %v173
    %v178 = vadd.f32 %v155, %v173
    %v179 = vadd.f32 %v156, %v173
    %v180 = vadd.f32 %v157, %v173
    %v181 = vadd.f32 %v158, %v173
    %v182 = vadd.f32 %v159, %v173
    %v183 = vadd.f32 %v160, %v173
    %v184 = vadd.f32 %v161, %v173
    %v185 = vadd.f32 %v162, %v173
    %v186 = vadd.f32 %v163, %v173
    %v187 = vadd.f32 %v164, %v173
    %v188 = vadd.f32 %v165, %v173
    %v189 = vadd.f32 %v166, %v173
    %v190 = vadd.f32 %v167, %v173
    %v191 = vxor.u32 %v175, 2147483648
    %v192 = vxor.u32 %v176, 2147483648
    %v193 = vxor.u32 %v177, 2147483648
    %v194 = vxor.u32 %v178, 2147483648
    %v195 = vxor.u32 %v179, 2147483648
    %v196 = vxor.u32 %v180, 2147483648
    %v197 = vxor.u32 %v181, 2147483648
    %v198 = vxor.u32 %v182, 2147483648
    %v199 = vxor.u32 %v183, 2147483648
    %v200 = vxor.u32 %v184, 2147483648
    %v201 = vxor.u32 %v185, 2147483648
    %v202 = vxor.u32 %v186, 2147483648
    %v203 = vxor.u32 %v187, 2147483648
    %v204 = vxor.u32 %v188, 2147483648
    %v205 = vxor.u32 %v189, 2147483648
    %v206 = vxor.u32 %v190, 2147483648
    %v207 = vmul.f32 %v191, 1.442695
    %v208 = vpow.pop %v207
    %v209 = vmul.f32 %v192, 1.442695
    %v210 = vpow.pop %v209
    %v211 = vmul.f32 %v193, 1.442695
    %v212 = vpow.pop %v211
    %v213 = vmul.f32 %v194, 1.442695
    %v214 = vpow.pop %v213
    %v215 = vmul.f32 %v195, 1.442695
    %v216 = vpow.pop %v215
    %v217 = vmul.f32 %v196, 1.442695
    %v218 = vpow.pop %v217
    %v219 = vmul.f32 %v197, 1.442695
    %v220 = vpow.pop %v219
    %v221 = vmul.f32 %v198, 1.442695
    %v222 = vpow.pop %v221
    %v223 = vmul.f32 %v199, 1.442695
    %v224 = vpow.pop %v223
    %v225 = vmul.f32 %v200, 1.442695
    %v226 = vpow.pop %v225
    %v227 = vmul.f32 %v201, 1.442695
    %v228 = vpow.pop %v227
    %v229 = vmul.f32 %v202, 1.442695
    %v230 = vpow.pop %v229
    %v231 = vmul.f32 %v203, 1.442695
    %v232 = vpow.pop %v231
    %v233 = vmul.f32 %v204, 1.442695
    %v234 = vpow.pop %v233
    %v235 = vmul.f32 %v205, 1.442695
    %v236 = vpow.pop %v235
    %v237 = vmul.f32 %v206, 1.442695
    %v238 = vpow.pop %v237
    %v239 = vadd.f32 %v208, 1.0
    %v240 = vadd.f32 %v210, 1.0
    %v241 = vadd.f32 %v212, 1.0
    %v242 = vadd.f32 %v214, 1.0
    %v243 = vadd.f32 %v216, 1.0
    %v244 = vadd.f32 %v218, 1.0
    %v245 = vadd.f32 %v220, 1.0
    %v246 = vadd.f32 %v222, 1.0
    %v247 = vadd.f32 %v224, 1.0
    %v248 = vadd.f32 %v226, 1.0
    %v249 = vadd.f32 %v228, 1.0
    %v250 = vadd.f32 %v230, 1.0
    %v251 = vadd.f32 %v232, 1.0
    %v252 = vadd.f32 %v234, 1.0
    %v253 = vadd.f32 %v236, 1.0
    %v254 = vadd.f32 %v238, 1.0
    %v255 = vrcp.pop %v239
    %v256 = vmul.f32 1.0, %v255
    %v257 = vrcp.pop %v240
    %v258 = vmul.f32 1.0, %v257
    %v259 = vrcp.pop %v241
    %v260 = vmul.f32 1.0, %v259
    %v261 = vrcp.pop %v242
    %v262 = vmul.f32 1.0, %v261
    %v263 = vrcp.pop %v243
    %v264 = vmul.f32 1.0, %v263
    %v265 = vrcp.pop %v244
    %v266 = vmul.f32 1.0, %v265
    %v267 = vrcp.pop %v245
    %v268 = vmul.f32 1.0, %v267
    %v269 = vrcp.pop %v246
    %v270 = vmul.f32 1.0, %v269
    %v271 = vrcp.pop %v247
    %v272 = vmul.f32 1.0, %v271
    %v273 = vrcp.pop %v248
    %v274 = vmul.f32 1.0, %v273
    %v275 = vrcp.pop %v249
    %v276 = vmul.f32 1.0, %v275
    %v277 = vrcp.pop %v250
    %v278 = vmul.f32 1.0, %v277
    %v279 = vrcp.pop %v251
    %v280 = vmul.f32 1.0, %v279
    %v281 = vrcp.pop %v252
    %v282 = vmul.f32 1.0, %v281
    %v283 = vrcp.pop %v253
    %v284 = vmul.f32 1.0, %v283
    %v285 = vrcp.pop %v254
    %v286 = vmul.f32 1.0, %v285
    %v287 = vtanh.pop %v175
    %v288 = vtanh.pop %v176
    %v289 = vtanh.pop %v177
    %v290 = vtanh.pop %v178
    %v291 = vtanh.pop %v179
    %v292 = vtanh.pop %v180
    %v293 = vtanh.pop %v181
    %v294 = vtanh.pop %v182
    %v295 = vtanh.pop %v183
    %v296 = vtanh.pop %v184
    %v297 = vtanh.pop %v185
    %v298 = vtanh.pop %v186
    %v299 = vtanh.pop %v187
    %v300 = vtanh.pop %v188
    %v301 = vtanh.pop %v189
    %v302 = vtanh.pop %v190
    %319 = vrot.lane.b32.xlu0 %v287, 64
    %v320 = vpop.permute.xlu0 %319
    %321 = vrot.lane.b32.xlu0 %v288, 64
    %v322 = vpop.permute.xlu0 %321
    %323 = vrot.lane.b32.xlu0 %v289, 64
    %v324 = vpop.permute.xlu0 %323
    %325 = vrot.lane.b32.xlu0 %v290, 64
    %v326 = vpop.permute.xlu0 %325
    %327 = vrot.lane.b32.xlu0 %v291, 64
    %v328 = vpop.permute.xlu0 %327
    %329 = vrot.lane.b32.xlu0 %v292, 64
    %v330 = vpop.permute.xlu0 %329
    %331 = vrot.lane.b32.xlu0 %v293, 64
    %v332 = vpop.permute.xlu0 %331
    %333 = vrot.lane.b32.xlu0 %v294, 64
    %v334 = vpop.permute.xlu0 %333
    %335 = vrot.lane.b32.xlu0 %v295, 64
    %v336 = vpop.permute.xlu0 %335
    %337 = vrot.lane.b32.xlu0 %v296, 64
    %v338 = vpop.permute.xlu0 %337
    %339 = vrot.lane.b32.xlu0 %v297, 64
    %v340 = vpop.permute.xlu0 %339
    %341 = vrot.lane.b32.xlu0 %v298, 64
    %v342 = vpop.permute.xlu0 %341
    %343 = vrot.lane.b32.xlu0 %v299, 64
    %v344 = vpop.permute.xlu0 %343
    %345 = vrot.lane.b32.xlu0 %v300, 64
    %v346 = vpop.permute.xlu0 %345
    %347 = vrot.lane.b32.xlu0 %v301, 64
    %v348 = vpop.permute.xlu0 %347
    %349 = vrot.lane.b32.xlu0 %v302, 64
    %v350 = vpop.permute.xlu0 %349
    %v367 = vmul.f32 %v256, %v320
    %v368 = vmul.f32 %v258, %v322
    %v369 = vmul.f32 %v260, %v324
    %v370 = vmul.f32 %v262, %v326
    %v371 = vmul.f32 %v264, %v328
    %v372 = vmul.f32 %v266, %v330
    %v373 = vmul.f32 %v268, %v332
    %v374 = vmul.f32 %v270, %v334
    %v375 = vmul.f32 %v272, %v336
    %v376 = vmul.f32 %v274, %v338
    %v377 = vmul.f32 %v276, %v340
    %v378 = vmul.f32 %v278, %v342
    %v379 = vmul.f32 %v280, %v344
    %v380 = vmul.f32 %v282, %v346
    %v381 = vmul.f32 %v284, %v348
    %v382 = vmul.f32 %v286, %v350
    %v383 = vtanh.pop %v367
    %v384 = vtanh.pop %v368
    %v385 = vtanh.pop %v369
    %v386 = vtanh.pop %v370
    %v387 = vtanh.pop %v371
    %v388 = vtanh.pop %v372
    %v389 = vtanh.pop %v373
    %v390 = vtanh.pop %v374
    %v391 = vtanh.pop %v375
    %v392 = vtanh.pop %v376
    %v393 = vtanh.pop %v377
    %v394 = vtanh.pop %v378
    %v395 = vtanh.pop %v379
    %v396 = vtanh.pop %v380
    %v397 = vtanh.pop %v381
    %v398 = vtanh.pop %v382
    %415 = vrot.lane.b32.xlu0 %v383, 96
    %v416 = vpop.permute.xlu0 %415
    %417 = vrot.lane.b32.xlu0 %v384, 96
    %v418 = vpop.permute.xlu0 %417
    %419 = vrot.lane.b32.xlu0 %v385, 96
    %v420 = vpop.permute.xlu0 %419
    %421 = vrot.lane.b32.xlu0 %v386, 96
    %v422 = vpop.permute.xlu0 %421
    %423 = vrot.lane.b32.xlu0 %v387, 96
    %v424 = vpop.permute.xlu0 %423
    %425 = vrot.lane.b32.xlu0 %v388, 96
    %v426 = vpop.permute.xlu0 %425
    %427 = vrot.lane.b32.xlu0 %v389, 96
    %v428 = vpop.permute.xlu0 %427
    %429 = vrot.lane.b32.xlu0 %v390, 96
    %v430 = vpop.permute.xlu0 %429
    %431 = vrot.lane.b32.xlu0 %v391, 96
    %v432 = vpop.permute.xlu0 %431
    %433 = vrot.lane.b32.xlu0 %v392, 96
    %v434 = vpop.permute.xlu0 %433
    %435 = vrot.lane.b32.xlu0 %v393, 96
    %v436 = vpop.permute.xlu0 %435
    %437 = vrot.lane.b32.xlu0 %v394, 96
    %v438 = vpop.permute.xlu0 %437
    %439 = vrot.lane.b32.xlu0 %v395, 96
    %v440 = vpop.permute.xlu0 %439
    %441 = vrot.lane.b32.xlu0 %v396, 96
    %v442 = vpop.permute.xlu0 %441
    %443 = vrot.lane.b32.xlu0 %v397, 96
    %v444 = vpop.permute.xlu0 %443
    %445 = vrot.lane.b32.xlu0 %v398, 96
    %v446 = vpop.permute.xlu0 %445
    %v463 = vmul.f32 %v256, %v416
    %v464 = vmul.f32 %v258, %v418
    %v465 = vmul.f32 %v260, %v420
    %v466 = vmul.f32 %v262, %v422
    %v467 = vmul.f32 %v264, %v424
    %v468 = vmul.f32 %v266, %v426
    %v469 = vmul.f32 %v268, %v428
    %v470 = vmul.f32 %v270, %v430
    %v471 = vmul.f32 %v272, %v432
    %v472 = vmul.f32 %v274, %v434
    %v473 = vmul.f32 %v276, %v436
    %v474 = vmul.f32 %v278, %v438
    %v475 = vmul.f32 %v280, %v440
    %v476 = vmul.f32 %v282, %v442
    %v477 = vmul.f32 %v284, %v444
    %v478 = vmul.f32 %v286, %v446
    %v479 = vld [vmem:[%s3] sm:$0xf]
    %v480 = vld [vmem:[%s3 + $0x4] sm:$0xf]
    %v481 = vld [vmem:[%s3 + $0x8] sm:$0xf]
    %v482 = vld [vmem:[%s3 + $0xc] sm:$0xf]
    %v483 = vld [vmem:[%s4] sm:$0x1]
    %v484 = vpack.c.bf16 %v464, %v463
    %v485 = vpack.c.bf16 %v466, %v465
    %v486 = vpack.c.bf16 %v468, %v467
    %v487 = vpack.c.bf16 %v470, %v469
    %v488 = vpack.c.bf16 %v472, %v471
    %v489 = vpack.c.bf16 %v474, %v473
    %v490 = vpack.c.bf16 %v476, %v475
    %v491 = vpack.c.bf16 %v478, %v477
    %v493 = vlaneseq
    %v494 = vshrl.u32 %v493, 7
    %v495 = vsub.s32 0, %v494
    %v496 = vrot.slane %v483, %v495
    %506 = vrot.lane.b32.xlu0 %v484, 32
    %v507 = vpop.permute.xlu0 %506
    %508 = vrot.lane.b32.xlu0 %v485, 32
    %v509 = vpop.permute.xlu0 %508
    %510 = vrot.lane.b32.xlu0 %v486, 32
    %v511 = vpop.permute.xlu0 %510
    %512 = vrot.lane.b32.xlu0 %v487, 32
    %v513 = vpop.permute.xlu0 %512
    %514 = vrot.lane.b32.xlu0 %v488, 32
    %v515 = vpop.permute.xlu0 %514
    %516 = vrot.lane.b32.xlu0 %v489, 32
    %v517 = vpop.permute.xlu0 %516
    %518 = vrot.lane.b32.xlu0 %v490, 32
    %v519 = vpop.permute.xlu0 %518
    %520 = vrot.lane.b32.xlu0 %v491, 32
    %v521 = vpop.permute.xlu0 %520
    %v526 = vunpack.c.l.b16 %v479
    %v527 = vunpack.c.l.b16 %v480
    %v528 = vunpack.c.l.b16 %v481
    %v529 = vunpack.c.l.b16 %v482
    %v530 = vpack.c.b16 %v527, %v526
    %v531 = vpack.c.b16 %v529, %v528
    %vm534 = vcmask 261120
    %v536 = vsel %vm534, %v507, 0
    %v539 = vsel %vm534, %v509, 0
    %v542 = vsel %vm534, %v511, 0
    %v545 = vsel %vm534, %v513, 0
    %v548 = vsel %vm534, %v515, 0
    %v551 = vsel %vm534, %v517, 0
    %v554 = vsel %vm534, %v519, 0
    %v557 = vsel %vm534, %v521, 0
    %559 = vmatprep.subr.bf16.mxu0 0
    %560 = vmatpush1.bf16.msra.mxu0 %v530
    %561 = vmatprep.subr.bf16.mxu0 0
    %562 = vmatpush1.bf16.msra.mxu0 %v531
    %563 = vmatprep.subr.bf16.mxu0 0
    %564 = vmatpush1.bf16.msra.mxu0 0
    %565 = vmatprep.subr.bf16.mxu0 0
    %566 = vmatpush1.bf16.msra.mxu0 0
    %567 = vmatprep.subr.bf16.mxu0 0
    %568 = vmatpush1.bf16.msra.mxu0 0
    %569 = vmatprep.subr.bf16.mxu0 0
    %570 = vmatpush1.bf16.msra.mxu0 0
    %571 = vmatprep.subr.bf16.mxu0 0
    %572 = vmatpush1.bf16.msra.mxu0 0
    %573 = vmatprep.subr.bf16.mxu0 0
    %574 = vmatpush1.bf16.msra.mxu0 0
    %575 = vmatprep.subr.bf16.mxu0 0
    %576 = vmatpush1.bf16.msra.mxu0 0
    %577 = vmatprep.subr.bf16.mxu0 0
    %578 = vmatpush1.bf16.msra.mxu0 0
    %579 = vmatprep.subr.bf16.mxu0 0
    %580 = vmatpush1.bf16.msra.mxu0 0
    %581 = vmatprep.subr.bf16.mxu0 0
    %582 = vmatpush1.bf16.msra.mxu0 0
    %583 = vmatprep.subr.bf16.mxu0 0
    %584 = vmatpush1.bf16.msra.mxu0 0
    %585 = vmatprep.subr.bf16.mxu0 0
    %586 = vmatpush1.bf16.msra.mxu0 0
    %587 = vmatprep.subr.bf16.mxu0 0
    %588 = vmatpush1.bf16.msra.mxu0 0
    %589 = vmatprep.subr.bf16.mxu0 0
    %590 = vmatpush1.bf16.msra.mxu0 0
    %591 = vmatprep.mubr.bf16.mxu0 0
    %592 = vmatmul.mubr.bf16.gmra.mrb[0].mxu0 %v536
    %v593 = vpop.f32.mrb[0].mxu0
    %v594 = vadd.f32 %v496, %v593
    %v595 = vpop.f32.mrb[0].mxu0
    %v596 = vpop.f32.mrb[0].mxu0
    %v597 = vadd.f32 %v496, %v596
    %v598 = vpop.f32.mrb[0].mxu0
    %599 = vmatprep.mubr.bf16.mxu0 0
    %600 = vmatmul.mubr.bf16.gmra.mrb[0].mxu0 %v539
    %v601 = vpop.f32.mrb[0].mxu0
    %v602 = vadd.f32 %v496, %v601
    %v603 = vpop.f32.mrb[0].mxu0
    %v604 = vpop.f32.mrb[0].mxu0
    %v605 = vadd.f32 %v496, %v604
    %v606 = vpop.f32.mrb[0].mxu0
    %607 = vmatprep.mubr.bf16.mxu0 0
    %608 = vmatmul.mubr.bf16.gmra.mrb[0].mxu0 %v542
    %v609 = vpop.f32.mrb[0].mxu0
    %v610 = vadd.f32 %v496, %v609
    %v611 = vpop.f32.mrb[0].mxu0
    %v612 = vpop.f32.mrb[0].mxu0
    %v613 = vadd.f32 %v496, %v612
    %v614 = vpop.f32.mrb[0].mxu0
    %615 = vmatprep.mubr.bf16.mxu0 0
    %616 = vmatmul.mubr.bf16.gmra.mrb[0].mxu0 %v545
    %v617 = vpop.f32.mrb[0].mxu0
    %v618 = vadd.f32 %v496, %v617
    %v619 = vpop.f32.mrb[0].mxu0
    %v620 = vpop.f32.mrb[0].mxu0
    %v621 = vadd.f32 %v496, %v620
    %v622 = vpop.f32.mrb[0].mxu0
    %623 = vmatprep.mubr.bf16.mxu0 0
    %624 = vmatmul.mubr.bf16.gmra.mrb[0].mxu0 %v548
    %v625 = vpop.f32.mrb[0].mxu0
    %v626 = vadd.f32 %v496, %v625
    %v627 = vpop.f32.mrb[0].mxu0
    %v628 = vpop.f32.mrb[0].mxu0
    %v629 = vadd.f32 %v496, %v628
    %v630 = vpop.f32.mrb[0].mxu0
    %631 = vmatprep.mubr.bf16.mxu0 0
    %632 = vmatmul.mubr.bf16.gmra.mrb[0].mxu0 %v551
    %v633 = vpop.f32.mrb[0].mxu0
    %v634 = vadd.f32 %v496, %v633
    %v635 = vpop.f32.mrb[0].mxu0
    %v636 = vpop.f32.mrb[0].mxu0
    %v637 = vadd.f32 %v496, %v636
    %v638 = vpop.f32.mrb[0].mxu0
    %639 = vmatprep.mubr.bf16.mxu0 0
    %640 = vmatmul.mubr.bf16.gmra.mrb[0].mxu0 %v554
    %v641 = vpop.f32.mrb[0].mxu0
    %v642 = vadd.f32 %v496, %v641
    %v643 = vpop.f32.mrb[0].mxu0
    %v644 = vpop.f32.mrb[0].mxu0
    %v645 = vadd.f32 %v496, %v644
    %v646 = vpop.f32.mrb[0].mxu0
    %647 = vmatprep.mubr.bf16.mxu0 0
    %648 = vmatmul.mubr.bf16.gmra.mrb[0].mxu0 %v557
    %v649 = vpop.f32.mrb[0].mxu0
    %v650 = vadd.f32 %v496, %v649
    %v651 = vpop.f32.mrb[0].mxu0
    %v652 = vpop.f32.mrb[0].mxu0
    %v653 = vadd.f32 %v496, %v652
    %v654 = vpop.f32.mrb[0].mxu0
    %655 = vdwg.mxu0
    %v656 = vxor.u32 %v594, 2147483648
    %v657 = vxor.u32 %v597, 2147483648
    %v658 = vxor.u32 %v602, 2147483648
    %v659 = vxor.u32 %v605, 2147483648
    %v660 = vxor.u32 %v610, 2147483648
    %v661 = vxor.u32 %v613, 2147483648
    %v662 = vxor.u32 %v618, 2147483648
    %v663 = vxor.u32 %v621, 2147483648
    %v664 = vxor.u32 %v626, 2147483648
    %v665 = vxor.u32 %v629, 2147483648
    %v666 = vxor.u32 %v634, 2147483648
    %v667 = vxor.u32 %v637, 2147483648
    %v668 = vxor.u32 %v642, 2147483648
    %v669 = vxor.u32 %v645, 2147483648
    %v670 = vxor.u32 %v650, 2147483648
    %v671 = vxor.u32 %v653, 2147483648
    %v672 = vmul.f32 %v656, 1.442695
    %v673 = vpow.pop %v672
    %v674 = vmul.f32 %v657, 1.442695
    %v675 = vpow.pop %v674
    %v676 = vmul.f32 %v658, 1.442695
    %v677 = vpow.pop %v676
    %v678 = vmul.f32 %v659, 1.442695
    %v679 = vpow.pop %v678
    %v680 = vmul.f32 %v660, 1.442695
    %v681 = vpow.pop %v680
    %v682 = vmul.f32 %v661, 1.442695
    %v683 = vpow.pop %v682
    %v684 = vmul.f32 %v662, 1.442695
    %v685 = vpow.pop %v684
    %v686 = vmul.f32 %v663, 1.442695
    %v687 = vpow.pop %v686
    %v688 = vmul.f32 %v664, 1.442695
    %v689 = vpow.pop %v688
    %v690 = vmul.f32 %v665, 1.442695
    %v691 = vpow.pop %v690
    %v692 = vmul.f32 %v666, 1.442695
    %v693 = vpow.pop %v692
    %v694 = vmul.f32 %v667, 1.442695
    %v695 = vpow.pop %v694
    %v696 = vmul.f32 %v668, 1.442695
    %v697 = vpow.pop %v696
    %v698 = vmul.f32 %v669, 1.442695
    %v699 = vpow.pop %v698
    %v700 = vmul.f32 %v670, 1.442695
    %v701 = vpow.pop %v700
    %v702 = vmul.f32 %v671, 1.442695
    %v703 = vpow.pop %v702
    %v704 = vadd.f32 %v673, 1.0
    %v705 = vadd.f32 %v675, 1.0
    %v706 = vadd.f32 %v677, 1.0
    %v707 = vadd.f32 %v679, 1.0
    %v708 = vadd.f32 %v681, 1.0
    %v709 = vadd.f32 %v683, 1.0
    %v710 = vadd.f32 %v685, 1.0
    %v711 = vadd.f32 %v687, 1.0
    %v712 = vadd.f32 %v689, 1.0
    %v713 = vadd.f32 %v691, 1.0
    %v714 = vadd.f32 %v693, 1.0
    %v715 = vadd.f32 %v695, 1.0
    %v716 = vadd.f32 %v697, 1.0
    %v717 = vadd.f32 %v699, 1.0
    %v718 = vadd.f32 %v701, 1.0
    %v719 = vadd.f32 %v703, 1.0
    %v720 = vrcp.pop %v704
    %v721 = vmul.f32 1.0, %v720
    %v722 = vrcp.pop %v705
    %v723 = vmul.f32 1.0, %v722
    %v724 = vrcp.pop %v706
    %v725 = vmul.f32 1.0, %v724
    %v726 = vrcp.pop %v707
    %v727 = vmul.f32 1.0, %v726
    %v728 = vrcp.pop %v708
    %v729 = vmul.f32 1.0, %v728
    %v730 = vrcp.pop %v709
    %v731 = vmul.f32 1.0, %v730
    %v732 = vrcp.pop %v710
    %v733 = vmul.f32 1.0, %v732
    %v734 = vrcp.pop %v711
    %v735 = vmul.f32 1.0, %v734
    %v736 = vrcp.pop %v712
    %v737 = vmul.f32 1.0, %v736
    %v738 = vrcp.pop %v713
    %v739 = vmul.f32 1.0, %v738
    %v740 = vrcp.pop %v714
    %v741 = vmul.f32 1.0, %v740
    %v742 = vrcp.pop %v715
    %v743 = vmul.f32 1.0, %v742
    %v744 = vrcp.pop %v716
    %v745 = vmul.f32 1.0, %v744
    %v746 = vrcp.pop %v717
    %v747 = vmul.f32 1.0, %v746
    %v748 = vrcp.pop %v718
    %v749 = vmul.f32 1.0, %v748
    %v750 = vrcp.pop %v719
    %v751 = vmul.f32 1.0, %v750
    %v752 = vtanh.pop %v594
    %v753 = vtanh.pop %v597
    %v754 = vtanh.pop %v602
    %v755 = vtanh.pop %v605
    %v756 = vtanh.pop %v610
    %v757 = vtanh.pop %v613
    %v758 = vtanh.pop %v618
    %v759 = vtanh.pop %v621
    %v760 = vtanh.pop %v626
    %v761 = vtanh.pop %v629
    %v762 = vtanh.pop %v634
    %v763 = vtanh.pop %v637
    %v764 = vtanh.pop %v642
    %v765 = vtanh.pop %v645
    %v766 = vtanh.pop %v650
    %v767 = vtanh.pop %v653
    %784 = vrot.lane.b32.xlu0 %v752, 64
    %v785 = vpop.permute.xlu0 %784
    %786 = vrot.lane.b32.xlu0 %v753, 64
    %v787 = vpop.permute.xlu0 %786
    %788 = vrot.lane.b32.xlu0 %v754, 64
    %v789 = vpop.permute.xlu0 %788
    %790 = vrot.lane.b32.xlu0 %v755, 64
    %v791 = vpop.permute.xlu0 %790
    %792 = vrot.lane.b32.xlu0 %v756, 64
    %v793 = vpop.permute.xlu0 %792
    %794 = vrot.lane.b32.xlu0 %v757, 64
    %v795 = vpop.permute.xlu0 %794
    %796 = vrot.lane.b32.xlu0 %v758, 64
    %v797 = vpop.permute.xlu0 %796
    %798 = vrot.lane.b32.xlu0 %v759, 64
    %v799 = vpop.permute.xlu0 %798
    %800 = vrot.lane.b32.xlu0 %v760, 64
    %v801 = vpop.permute.xlu0 %800
    %802 = vrot.lane.b32.xlu0 %v761, 64
    %v803 = vpop.permute.xlu0 %802
    %804 = vrot.lane.b32.xlu0 %v762, 64
    %v805 = vpop.permute.xlu0 %804
    %806 = vrot.lane.b32.xlu0 %v763, 64
    %v807 = vpop.permute.xlu0 %806
    %808 = vrot.lane.b32.xlu0 %v764, 64
    %v809 = vpop.permute.xlu0 %808
    %810 = vrot.lane.b32.xlu0 %v765, 64
    %v811 = vpop.permute.xlu0 %810
    %812 = vrot.lane.b32.xlu0 %v766, 64
    %v813 = vpop.permute.xlu0 %812
    %814 = vrot.lane.b32.xlu0 %v767, 64
    %v815 = vpop.permute.xlu0 %814
    %v832 = vmul.f32 %v721, %v785
    %v833 = vmul.f32 %v723, %v787
    %v834 = vmul.f32 %v725, %v789
    %v835 = vmul.f32 %v727, %v791
    %v836 = vmul.f32 %v729, %v793
    %v837 = vmul.f32 %v731, %v795
    %v838 = vmul.f32 %v733, %v797
    %v839 = vmul.f32 %v735, %v799
    %v840 = vmul.f32 %v737, %v801
    %v841 = vmul.f32 %v739, %v803
    %v842 = vmul.f32 %v741, %v805
    %v843 = vmul.f32 %v743, %v807
    %v844 = vmul.f32 %v745, %v809
    %v845 = vmul.f32 %v747, %v811
    %v846 = vmul.f32 %v749, %v813
    %v847 = vmul.f32 %v751, %v815
    %v848 = vtanh.pop %v832
    %v849 = vtanh.pop %v833
    %v850 = vtanh.pop %v834
    %v851 = vtanh.pop %v835
    %v852 = vtanh.pop %v836
    %v853 = vtanh.pop %v837
    %v854 = vtanh.pop %v838
    %v855 = vtanh.pop %v839
    %v856 = vtanh.pop %v840
    %v857 = vtanh.pop %v841
    %v858 = vtanh.pop %v842
    %v859 = vtanh.pop %v843
    %v860 = vtanh.pop %v844
    %v861 = vtanh.pop %v845
    %v862 = vtanh.pop %v846
    %v863 = vtanh.pop %v847
    %880 = vrot.lane.b32.xlu0 %v848, 96
    %v881 = vpop.permute.xlu0 %880
    %882 = vrot.lane.b32.xlu0 %v849, 96
    %v883 = vpop.permute.xlu0 %882
    %884 = vrot.lane.b32.xlu0 %v850, 96
    %v885 = vpop.permute.xlu0 %884
    %886 = vrot.lane.b32.xlu0 %v851, 96
    %v887 = vpop.permute.xlu0 %886
    %888 = vrot.lane.b32.xlu0 %v852, 96
    %v889 = vpop.permute.xlu0 %888
    %890 = vrot.lane.b32.xlu0 %v853, 96
    %v891 = vpop.permute.xlu0 %890
    %892 = vrot.lane.b32.xlu0 %v854, 96
    %v893 = vpop.permute.xlu0 %892
    %894 = vrot.lane.b32.xlu0 %v855, 96
    %v895 = vpop.permute.xlu0 %894
    %896 = vrot.lane.b32.xlu0 %v856, 96
    %v897 = vpop.permute.xlu0 %896
    %898 = vrot.lane.b32.xlu0 %v857, 96
    %v899 = vpop.permute.xlu0 %898
    %900 = vrot.lane.b32.xlu0 %v858, 96
    %v901 = vpop.permute.xlu0 %900
    %902 = vrot.lane.b32.xlu0 %v859, 96
    %v903 = vpop.permute.xlu0 %902
    %904 = vrot.lane.b32.xlu0 %v860, 96
    %v905 = vpop.permute.xlu0 %904
    %906 = vrot.lane.b32.xlu0 %v861, 96
    %v907 = vpop.permute.xlu0 %906
    %908 = vrot.lane.b32.xlu0 %v862, 96
    %v909 = vpop.permute.xlu0 %908
    %910 = vrot.lane.b32.xlu0 %v863, 96
    %v911 = vpop.permute.xlu0 %910
    %v928 = vmul.f32 %v721, %v881
    %v929 = vmul.f32 %v723, %v883
    %v930 = vmul.f32 %v725, %v885
    %v931 = vmul.f32 %v727, %v887
    %v932 = vmul.f32 %v729, %v889
    %v933 = vmul.f32 %v731, %v891
    %v934 = vmul.f32 %v733, %v893
    %v935 = vmul.f32 %v735, %v895
    %v936 = vmul.f32 %v737, %v897
    %v937 = vmul.f32 %v739, %v899
    %v938 = vmul.f32 %v741, %v901
    %v939 = vmul.f32 %v743, %v903
    %v940 = vmul.f32 %v745, %v905
    %v941 = vmul.f32 %v747, %v907
    %v942 = vmul.f32 %v749, %v909
    %v943 = vmul.f32 %v751, %v911
    %v944 = vld [vmem:[%s5] sm:$0x1]
    %s945 = sld [smem:[#allocation2]]
    %v947 = vlaneseq
    %v948 = vshrl.u32 %v947, 7
    %v949 = vsub.s32 0, %v948
    %v950 = vrot.slane %v944, %v949
    %951 = vrot.lane.b32.xlu0 %v950, 96
    %v952 = vpop.permute.xlu0 %951
    %v954 = vmul.f32 %v928, %v952
    %v955 = vmul.f32 %v929, %v952
    %v956 = vmul.f32 %v930, %v952
    %v957 = vmul.f32 %v931, %v952
    %v958 = vmul.f32 %v932, %v952
    %v959 = vmul.f32 %v933, %v952
    %v960 = vmul.f32 %v934, %v952
    %v961 = vmul.f32 %v935, %v952
    %v962 = vmul.f32 %v936, %v952
    %v963 = vmul.f32 %v937, %v952
    %v964 = vmul.f32 %v938, %v952
    %v965 = vmul.f32 %v939, %v952
    %v966 = vmul.f32 %v940, %v952
    %v967 = vmul.f32 %v941, %v952
    %v968 = vmul.f32 %v942, %v952
    %v969 = vmul.f32 %v943, %v952
    %986 = vrot.lane.b32.xlu0 %v954, 32
    %v987 = vpop.permute.xlu0 %986
    %988 = vrot.lane.b32.xlu0 %v955, 32
    %v989 = vpop.permute.xlu0 %988
    %990 = vrot.lane.b32.xlu0 %v956, 32
    %v991 = vpop.permute.xlu0 %990
    %992 = vrot.lane.b32.xlu0 %v957, 32
    %v993 = vpop.permute.xlu0 %992
    %994 = vrot.lane.b32.xlu0 %v958, 32
    %v995 = vpop.permute.xlu0 %994
    %996 = vrot.lane.b32.xlu0 %v959, 32
    %v997 = vpop.permute.xlu0 %996
    %998 = vrot.lane.b32.xlu0 %v960, 32
    %v999 = vpop.permute.xlu0 %998
    %1000 = vrot.lane.b32.xlu0 %v961, 32
    %v1001 = vpop.permute.xlu0 %1000
    %1002 = vrot.lane.b32.xlu0 %v962, 32
    %v1003 = vpop.permute.xlu0 %1002
    %1004 = vrot.lane.b32.xlu0 %v963, 32
    %v1005 = vpop.permute.xlu0 %1004
    %1006 = vrot.lane.b32.xlu0 %v964, 32
    %v1007 = vpop.permute.xlu0 %1006
    %1008 = vrot.lane.b32.xlu0 %v965, 32
    %v1009 = vpop.permute.xlu0 %1008
    %1010 = vrot.lane.b32.xlu0 %v966, 32
    %v1011 = vpop.permute.xlu0 %1010
    %1012 = vrot.lane.b32.xlu0 %v967, 32
    %v1013 = vpop.permute.xlu0 %1012
    %1014 = vrot.lane.b32.xlu0 %v968, 32
    %v1015 = vpop.permute.xlu0 %1014
    %1016 = vrot.lane.b32.xlu0 %v969, 32
    %v1017 = vpop.permute.xlu0 %1016
    %v1034 = vsel %vm534, %v987, 0.0
    %1035 = vadd.xlane.f32.xlu0 %v1034
    %v1036 = vpop.xlane.xlu0 %1035
    %v1037 = vsel %vm534, %v989, 0.0
    %1038 = vadd.xlane.f32.xlu0 %v1037
    %v1039 = vpop.xlane.xlu0 %1038
    %v1040 = vsel %vm534, %v991, 0.0
    %1041 = vadd.xlane.f32.xlu0 %v1040
    %v1042 = vpop.xlane.xlu0 %1041
    %v1043 = vsel %vm534, %v993, 0.0
    %1044 = vadd.xlane.f32.xlu0 %v1043
    %v1045 = vpop.xlane.xlu0 %1044
    %v1046 = vsel %vm534, %v995, 0.0
    %1047 = vadd.xlane.f32.xlu0 %v1046
    %v1048 = vpop.xlane.xlu0 %1047
    %v1049 = vsel %vm534, %v997, 0.0
    %1050 = vadd.xlane.f32.xlu0 %v1049
    %v1051 = vpop.xlane.xlu0 %1050
    %v1052 = vsel %vm534, %v999, 0.0
    %1053 = vadd.xlane.f32.xlu0 %v1052
    %v1054 = vpop.xlane.xlu0 %1053
    %v1055 = vsel %vm534, %v1001, 0.0
    %1056 = vadd.xlane.f32.xlu0 %v1055
    %v1057 = vpop.xlane.xlu0 %1056
    %v1058 = vsel %vm534, %v1003, 0.0
    %1059 = vadd.xlane.f32.xlu0 %v1058
    %v1060 = vpop.xlane.xlu0 %1059
    %v1061 = vsel %vm534, %v1005, 0.0
    %1062 = vadd.xlane.f32.xlu0 %v1061
    %v1063 = vpop.xlane.xlu0 %1062
    %v1064 = vsel %vm534, %v1007, 0.0
    %1065 = vadd.xlane.f32.xlu0 %v1064
    %v1066 = vpop.xlane.xlu0 %1065
    %v1067 = vsel %vm534, %v1009, 0.0
    %1068 = vadd.xlane.f32.xlu0 %v1067
    %v1069 = vpop.xlane.xlu0 %1068
    %v1070 = vsel %vm534, %v1011, 0.0
    %1071 = vadd.xlane.f32.xlu0 %v1070
    %v1072 = vpop.xlane.xlu0 %1071
    %v1073 = vsel %vm534, %v1013, 0.0
    %1074 = vadd.xlane.f32.xlu0 %v1073
    %v1075 = vpop.xlane.xlu0 %1074
    %v1076 = vsel %vm534, %v1015, 0.0
    %1077 = vadd.xlane.f32.xlu0 %v1076
    %v1078 = vpop.xlane.xlu0 %1077
    %v1079 = vsel %vm534, %v1017, 0.0
    %1080 = vadd.xlane.f32.xlu0 %v1079
    %v1081 = vpop.xlane.xlu0 %1080
    %v1082 = vstv %s945
    %v1083 = vadd.f32 %v1036, %v1082
    %v1084 = vadd.f32 %v1039, %v1082
    %v1085 = vadd.f32 %v1042, %v1082
    %v1086 = vadd.f32 %v1045, %v1082
    %v1087 = vadd.f32 %v1048, %v1082
    %v1088 = vadd.f32 %v1051, %v1082
    %v1089 = vadd.f32 %v1054, %v1082
    %v1090 = vadd.f32 %v1057, %v1082
    %v1091 = vadd.f32 %v1060, %v1082
    %v1092 = vadd.f32 %v1063, %v1082
    %v1093 = vadd.f32 %v1066, %v1082
    %v1094 = vadd.f32 %v1069, %v1082
    %v1095 = vadd.f32 %v1072, %v1082
    %v1096 = vadd.f32 %v1075, %v1082
    %v1097 = vadd.f32 %v1078, %v1082
    %v1098 = vadd.f32 %v1081, %v1082
    %vm1099 = vcmask 7168
    %1100 = vst.msk [vmem:[%s7] sm:$0xff] %vm1099, %v1083
    %1101 = vst.msk [vmem:[%s7 + $0x8] sm:$0xff] %vm1099, %v1084
    %1102 = vst.msk [vmem:[%s7 + $0x10] sm:$0xff] %vm1099, %v1085
    %1103 = vst.msk [vmem:[%s7 + $0x18] sm:$0xff] %vm1099, %v1086
    %1104 = vst.msk [vmem:[%s7 + $0x20] sm:$0xff] %vm1099, %v1087
    %1105 = vst.msk [vmem:[%s7 + $0x28] sm:$0xff] %vm1099, %v1088
    %1106 = vst.msk [vmem:[%s7 + $0x30] sm:$0xff] %vm1099, %v1089
    %1107 = vst.msk [vmem:[%s7 + $0x38] sm:$0xff] %vm1099, %v1090
    %1108 = vst.msk [vmem:[%s7 + $0x40] sm:$0xff] %vm1099, %v1091
    %1109 = vst.msk [vmem:[%s7 + $0x48] sm:$0xff] %vm1099, %v1092
    %1110 = vst.msk [vmem:[%s7 + $0x50] sm:$0xff] %vm1099, %v1093
    %1111 = vst.msk [vmem:[%s7 + $0x58] sm:$0xff] %vm1099, %v1094
    %1112 = vst.msk [vmem:[%s7 + $0x60] sm:$0xff] %vm1099, %v1095
    %1113 = vst.msk [vmem:[%s7 + $0x68] sm:$0xff] %vm1099, %v1096
    %1114 = vst.msk [vmem:[%s7 + $0x70] sm:$0xff] %vm1099, %v1097
    %1115 = vst.msk [vmem:[%s7 + $0x78] sm:$0xff] %vm1099, %v1098
    // Predicated region
    $region34: #{tpu_custom_call.1} parent=1 // pred_check
      _
    $region35: #{tpu_custom_call.1} parent=1 // pred_check_branch
      %1117 = sbr.rel (0) target = $region37
    $region36: #{tpu_custom_call.1} parent=1 // pred_region
      _
    $region37: #{tpu_custom_call.1} parent=1 // pred_fallthru
      _
    // Predicated region
    $region38: #{tpu_custom_call.1} parent=1 // pred_check
      _
    $region39: #{tpu_custom_call.1} parent=1 // pred_check_branch
      %1119 = sbr.rel (0) target = $region41
    $region40: #{tpu_custom_call.1} parent=1 // pred_region
      _
    $region41: #{tpu_custom_call.1} parent=1 // pred_fallthru
      _
    %1120 = vsyncpa [#allocation4], 1

</llo_original>
